<compile_context>
chip_gen: v5e
topology: v5e:2x2
jax: 0.10.0
libtpu: 0.0.40
codegen_flags: <defaults>
</compile_context>

<pallas_src>
import functools
import math

import jax
import jax.numpy as jnp
from jax.experimental import pallas as pl
from jax.experimental.pallas import tpu as pltpu


def _round_up(x, m):
    return ((x + m - 1) // m) * m


# ----------------------------------------------------------------------------
# Pallas kernel: fused time-embedding + class-embedding + conditional MLP
# ----------------------------------------------------------------------------
def _cond_ddpm_kernel(
    x_ref,      # [TB, D_pad]      bf16  input data (zero padded)
    t_ref,      # [TB, 1]          f32   timesteps
    y_ref,      # [TB, 1]          int32 class labels (zeros if unconditional)
    ctab_ref,   # [C_pad, D_pad]   bf16  class-embedding table (zero padded)
    w1_ref,     # [3*D_pad, H_pad] bf16  stacked/padded W1 = [w1x; w1c; w1t]
    b1_ref,     # [1, H_pad]       f32
    w2_ref,     # [H_pad, H_pad]   bf16
    b2_ref,     # [1, H_pad]       f32
    w3_ref,     # [H_pad, D_pad]   bf16
    b3_ref,     # [1, D_pad]       f32
    out_ref,    # [TB, D_pad]      f32   predicted noise (zero padded)
    *,
    half,       # static: n_dim // 2
    use_class,  # static: conditional vs unconditional branch
):
    f32 = jnp.float32
    bf16 = jnp.bfloat16
    TB, D_pad = x_ref.shape
    C_pad = ctab_ref.shape[0]

    # --- sinusoidal time embedding, computed in-kernel (EUP exp/sin/cos) ---------
    t_col = t_ref[...]                                            # [TB, 1] f32
    lane = jax.lax.broadcasted_iota(jnp.int32, (1, D_pad), 1)     # [1, D_pad]
    sin_mask = lane < half
    cos_mask = jnp.logical_and(lane >= half, lane < 2 * half)
    k = jnp.where(sin_mask, lane, lane - half).astype(f32)
    scale = -math.log(10000.0) / float(max(half, 1))
    freqs = jnp.exp(k * scale)                                    # [1, D_pad]
    args = t_col * freqs                                          # [TB, D_pad]
    temb = (jnp.where(sin_mask, jnp.sin(args), 0.0)
            + jnp.where(cos_mask, jnp.cos(args), 0.0))            # f32, zero in pad lanes

    # --- class embedding gather as a one-hot matmul on the MXU -------------------
    if use_class:
        y_col = y_ref[...]                                        # [TB, 1] int32
        cls_iota = jax.lax.broadcasted_iota(jnp.int32, (TB, C_pad), 1)
        onehot = jnp.where(y_col == cls_iota, 1.0, 0.0).astype(bf16)
        cls = jnp.dot(onehot, ctab_ref[...], preferred_element_type=f32)
    else:
        cls = jnp.zeros((TB, D_pad), f32)                         # y is None branch

    # --- layer 1: single matmul over the concatenated [x | cls | temb] ----------
    inp = jnp.concatenate(
        [x_ref[...], cls.astype(bf16), temb.astype(bf16)], axis=-1)   # [TB, 3*D_pad]
    h = jnp.dot(inp, w1_ref[...], preferred_element_type=f32) + b1_ref[...]
    h = jnp.maximum(h, 0.0)                                       # ReLU in f32 (v5e safe)

    # --- layer 2 -----------------------------------------------------------------
    h = jnp.dot(h.astype(bf16), w2_ref[...], preferred_element_type=f32) + b2_ref[...]
    h = jnp.maximum(h, 0.0)

    # --- layer 3 (output, no activation) ------------------------------------------
    out = jnp.dot(h.astype(bf16), w3_ref[...], preferred_element_type=f32) + b3_ref[...]
    out_ref[...] = out.astype(out_ref.dtype)


def _run_fused_forward(x_p, t_p, y_p, kparams, *, half, use_class, TB):
    B_pad, D_pad = x_p.shape
    H_pad = kparams["w2"].shape[0]
    C_pad = kparams["class_embed"].shape[0]
    grid = (B_pad // TB,)

    def batch_spec(shape):
        return pl.BlockSpec(shape, lambda i: (i, 0))

    def fixed_spec(shape):
        return pl.BlockSpec(shape, lambda i: (0, 0))

    kernel = functools.partial(_cond_ddpm_kernel, half=half, use_class=use_class)

    return pl.pallas_call(
        kernel,
        out_shape=jax.ShapeDtypeStruct((B_pad, D_pad), jnp.float32),
        grid=grid,
        in_specs=[
            batch_spec((TB, D_pad)),          # x
            batch_spec((TB, 1)),              # t
            batch_spec((TB, 1)),              # y
            fixed_spec((C_pad, D_pad)),       # class embedding table (resident)
            fixed_spec((3 * D_pad, H_pad)),   # W1 (resident)
            fixed_spec((1, H_pad)),           # b1
            fixed_spec((H_pad, H_pad)),       # W2
            fixed_spec((1, H_pad)),           # b2
            fixed_spec((H_pad, D_pad)),       # W3
            fixed_spec((1, D_pad)),           # b3
        ],
        out_specs=batch_spec((TB, D_pad)),
        compiler_params=pltpu.CompilerParams(
            dimension_semantics=("parallel",),        # shards batch tiles across TCs on v7x
            vmem_limit_bytes=32 * 1024 * 1024,        # explicit budget (fits v7x's 64 MiB)
        ),
    )(x_p, t_p, y_p, kparams["class_embed"], kparams["w1"], kparams["b1"],
      kparams["w2"], kparams["b2"], kparams["w3"], kparams["b3"])


# ----------------------------------------------------------------------------
# Parameter init (raw, PyTorch-like) and one-time padding to lane width
# ----------------------------------------------------------------------------
def init_params(key, n_dim, n_classes, hidden):
    ks = jax.random.split(key, 4)
    in_dim = 3 * n_dim

    def linear_init(k, fan_in, fan_out):
        bound = 1.0 / math.sqrt(fan_in)          # like nn.Linear default init
        kw, kb = jax.random.split(k)
        w = jax.random.uniform(kw, (fan_in, fan_out), jnp.float32, -bound, bound)
        b = jax.random.uniform(kb, (1, fan_out), jnp.float32, -bound, bound)
        return w, b

    w1, b1 = linear_init(ks[0], in_dim, hidden)
    w2, b2 = linear_init(ks[1], hidden, hidden)
    w3, b3 = linear_init(ks[2], hidden, n_dim)
    class_embed = jax.random.normal(ks[3], (n_classes, n_dim), jnp.float32)
    return {"w1": w1, "b1": b1, "w2": w2, "b2": b2, "w3": w3, "b3": b3,
            "class_embed": class_embed}


def pad_kernel_params(params, n_dim, n_classes, hidden):
    """Zero-pad feature dims to 128 lanes; cast matmul weights/table to bf16 once."""
    D_pad = _round_up(n_dim, 128)
    H_pad = _round_up(hidden, 128)
    C_pad = _round_up(n_classes, 128)

    def pad2(a, rows, cols):
        return jnp.zeros((rows, cols), a.dtype).at[:a.shape[0], :a.shape[1]].set(a)

    w1 = params["w1"]
    w1x, w1c, w1t = w1[:n_dim], w1[n_dim:2 * n_dim], w1[2 * n_dim:3 * n_dim]
    w1_pad = jnp.concatenate(
        [pad2(w1x, D_pad, H_pad), pad2(w1c, D_pad, H_pad), pad2(w1t, D_pad, H_pad)],
        axis=0,
    ).astype(jnp.bfloat16)

    return {
        "w1": w1_pad,                                                   # [3*D_pad, H_pad] bf16
        "b1": pad2(params["b1"], 1, H_pad),                             # f32
        "w2": pad2(params["w2"], H_pad, H_pad).astype(jnp.bfloat16),
        "b2": pad2(params["b2"], 1, H_pad),
        "w3": pad2(params["w3"], H_pad, D_pad).astype(jnp.bfloat16),
        "b3": pad2(params["b3"], 1, D_pad),
        "class_embed": pad2(params["class_embed"], C_pad, D_pad).astype(jnp.bfloat16),
    }


# ----------------------------------------------------------------------------
# Forward wrapper (mirrors ConditionalDDPM.forward(x, t, y))
# ----------------------------------------------------------------------------
@functools.partial(jax.jit, static_argnames=("use_class",))
def _forward_jit(kparams, x, t, y, use_class):
    B, n_dim = x.shape
    D_pad = kparams["b3"].shape[1]
    half = n_dim // 2

    B_pad = _round_up(B, 8)
    TB = min(B_pad, 128)
    B_pad = _round_up(B_pad, TB)

    x_p = jnp.zeros((B_pad, D_pad), jnp.bfloat16).at[:B, :n_dim].set(
        x.astype(jnp.bfloat16))
    t_p = jnp.zeros((B_pad, 1), jnp.float32).at[:B, 0].set(t.astype(jnp.float32))
    y_p = jnp.zeros((B_pad, 1), jnp.int32).at[:B, 0].set(y.astype(jnp.int32))

    out_p = _run_fused_forward(x_p, t_p, y_p, kparams,
                               half=half, use_class=use_class, TB=TB)
    return out_p[:B, :n_dim]


def conditional_ddpm_forward(kparams, x, t, y=None):
    """x: [B, n_dim], t: [B], y: [B] or None -> predicted noise [B, n_dim]."""
    use_class = y is not None
    if y is None:
        y = jnp.zeros((x.shape[0],), jnp.int32)
    return _forward_jit(kparams, x, t, y, use_class=use_class)


# ----------------------------------------------------------------------------
# Pure-JAX f32 reference (same math, no Pallas) for a sanity check
# ----------------------------------------------------------------------------
def sinusoidal_time_embedding(t, dim):
    half = dim // 2
    t = t.astype(jnp.float32)
    freqs = jnp.exp(-math.log(10000.0)
                    * jnp.arange(half, dtype=jnp.float32) / max(half, 1))
    args = t[:, None] * freqs[None, :]
    emb = jnp.concatenate([jnp.sin(args), jnp.cos(args)], axis=-1)
    if emb.shape[-1] < dim:
        emb = jnp.pad(emb, ((0, 0), (0, dim - emb.shape[-1])))
    return emb.astype(jnp.float32)


def reference_forward(params, x, t, y=None):
    B, n_dim = x.shape
    temb = sinusoidal_time_embedding(t, n_dim)
    if y is None:
        cls = jnp.zeros((B, n_dim), jnp.float32)
    else:
        cls = jnp.take(params["class_embed"], y, axis=0)
    inp = jnp.concatenate([x, cls, temb], axis=-1)
    h = jnp.maximum(inp @ params["w1"] + params["b1"], 0.0)
    h = jnp.maximum(h @ params["w2"] + params["b2"], 0.0)
    return h @ params["w3"] + params["b3"]


# ----------------------------------------------------------------------------
if __name__ == "__main__":
    n_dim = 4
    n_steps = 200
    n_classes = 2
    hidden = 32
    batch = 8

    key = jax.random.PRNGKey(0)
    k_param, k_x, k_t, k_y = jax.random.split(key, 4)

    params = init_params(k_param, n_dim, n_classes, hidden)
    kparams = pad_kernel_params(params, n_dim, n_classes, hidden)

    x = jax.random.normal(k_x, (batch, n_dim), jnp.float32)
    t = jax.random.randint(k_t, (batch,), 0, n_steps, jnp.int32)
    y = jax.random.randint(k_y, (batch,), 0, n_classes, jnp.int32)

    # conditional (y given) and unconditional (y is None -> zero class embedding)
    out_cond = jax.block_until_ready(conditional_ddpm_forward(kparams, x, t, y))
    out_uncond = jax.block_until_ready(conditional_ddpm_forward(kparams, x, t, None))

    # sanity check vs full-f32 reference (kernel uses bf16 matmul operands,
    # f32 accumulation -> loose tolerance)
    ref_cond = reference_forward(params, x, t, y)
    ref_uncond = reference_forward(params, x, t, None)
    assert out_cond.shape == (batch, n_dim) and out_cond.dtype == jnp.float32
    assert jnp.allclose(out_cond, ref_cond, atol=1e-1, rtol=1e-1)
    assert jnp.allclose(out_uncond, ref_uncond, atol=1e-1, rtol=1e-1)

    print("KERNEL_OK")
</pallas_src>

<mosaic_0001>
module attributes {stable_mosaic.version = 11 : i64} {
  func.func @_cond_ddpm_kernel(%arg0: i32, %arg1: memref<8x128xbf16, #tpu.memory_space<vmem>>, %arg2: memref<8x1xf32, #tpu.memory_space<vmem>>, %arg3: memref<8x1xi32, #tpu.memory_space<vmem>>, %arg4: memref<128x128xbf16, #tpu.memory_space<vmem>>, %arg5: memref<384x128xbf16, #tpu.memory_space<vmem>>, %arg6: memref<1x128xf32, #tpu.memory_space<vmem>>, %arg7: memref<128x128xbf16, #tpu.memory_space<vmem>>, %arg8: memref<1x128xf32, #tpu.memory_space<vmem>>, %arg9: memref<128x128xbf16, #tpu.memory_space<vmem>>, %arg10: memref<1x128xf32, #tpu.memory_space<vmem>>, %arg11: memref<8x128xf32, #tpu.memory_space<vmem>>) attributes {dimension_semantics = [#tpu.dimension_semantics<parallel>], iteration_bounds = array<i64: 1>, scalar_prefetch = 0 : i64, scratch_operands = 0 : i64, tpu.core_type = #tpu.core_type<tc>, window_params = [{transform_indices = @transform_0, window_bounds = array<i64: 8, 128>}, {transform_indices = @transform_1, window_bounds = array<i64: 8, 1>}, {transform_indices = @transform_2, window_bounds = array<i64: 8, 1>}, {pipeline_mode = #tpu.pipeline_mode<synchronous>, transform_indices = @transform_3, window_bounds = array<i64: 128, 128>}, {pipeline_mode = #tpu.pipeline_mode<synchronous>, transform_indices = @transform_4, window_bounds = array<i64: 384, 128>}, {pipeline_mode = #tpu.pipeline_mode<synchronous>, transform_indices = @transform_5, window_bounds = array<i64: 1, 128>}, {pipeline_mode = #tpu.pipeline_mode<synchronous>, transform_indices = @transform_6, window_bounds = array<i64: 128, 128>}, {pipeline_mode = #tpu.pipeline_mode<synchronous>, transform_indices = @transform_7, window_bounds = array<i64: 1, 128>}, {pipeline_mode = #tpu.pipeline_mode<synchronous>, transform_indices = @transform_8, window_bounds = array<i64: 128, 128>}, {pipeline_mode = #tpu.pipeline_mode<synchronous>, transform_indices = @transform_9, window_bounds = array<i64: 1, 128>}, {transform_indices = @transform_10, window_bounds = array<i64: 8, 128>}]} {
    %c0 = arith.constant 0 : index
    %c0_0 = arith.constant 0 : index
    %0 = vector.load %arg2[%c0, %c0_0] : memref<8x1xf32, #tpu.memory_space<vmem>>, vector<8x1xf32>
    %1 = tpu.iota {dimensions = array<i32: 1>} : vector<1x128xi32>
    %c2_i32 = arith.constant 2 : i32
    %2 = vector.broadcast %c2_i32 : i32 to vector<1x128xi32>
    %3 = arith.cmpi slt, %1, %2 : vector<1x128xi32>
    %c2_i32_1 = arith.constant 2 : i32
    %4 = vector.broadcast %c2_i32_1 : i32 to vector<1x128xi32>
    %5 = arith.cmpi sge, %1, %4 : vector<1x128xi32>
    %c4_i32 = arith.constant 4 : i32
    %6 = vector.broadcast %c4_i32 : i32 to vector<1x128xi32>
    %7 = arith.cmpi slt, %1, %6 : vector<1x128xi32>
    %8 = arith.andi %5, %7 : vector<1x128xi1>
    %c2_i32_2 = arith.constant 2 : i32
    %9 = vector.broadcast %c2_i32_2 : i32 to vector<1x128xi32>
    %10 = arith.subi %1, %9 : vector<1x128xi32>
    %11 = arith.select %3, %1, %10 : vector<1x128xi1>, vector<1x128xi32>
    %12 = arith.sitofp %11 : vector<1x128xi32> to vector<1x128xf32>
    %cst = arith.constant -4.60517025 : f32
    %13 = vector.broadcast %cst : f32 to vector<1x128xf32>
    %14 = arith.mulf %12, %13 : vector<1x128xf32>
    %15 = math.exp %14 : vector<1x128xf32>
    %16 = vector.broadcast %0 : vector<8x1xf32> to vector<8x128xf32>
    %17 = vector.broadcast %15 : vector<1x128xf32> to vector<8x128xf32>
    %18 = arith.mulf %16, %17 : vector<8x128xf32>
    %19 = math.sin %18 : vector<8x128xf32>
    %cst_3 = arith.constant 0.000000e+00 : f32
    %20 = vector.shape_cast %3 : vector<1x128xi1> to vector<1x128xi1>
    %21 = vector.broadcast %20 : vector<1x128xi1> to vector<8x128xi1>
    %22 = vector.broadcast %cst_3 : f32 to vector<8x128xf32>
    %23 = arith.select %21, %19, %22 : vector<8x128xi1>, vector<8x128xf32>
    %24 = math.cos %18 : vector<8x128xf32>
    %cst_4 = arith.constant 0.000000e+00 : f32
    %25 = vector.shape_cast %8 : vector<1x128xi1> to vector<1x128xi1>
    %26 = vector.broadcast %25 : vector<1x128xi1> to vector<8x128xi1>
    %27 = vector.broadcast %cst_4 : f32 to vector<8x128xf32>
    %28 = arith.select %26, %24, %27 : vector<8x128xi1>, vector<8x128xf32>
    %29 = arith.addf %23, %28 : vector<8x128xf32>
    %c0_5 = arith.constant 0 : index
    %c0_6 = arith.constant 0 : index
    %30 = vector.load %arg3[%c0_5, %c0_6] : memref<8x1xi32, #tpu.memory_space<vmem>>, vector<8x1xi32>
    %31 = tpu.iota {dimensions = array<i32: 1>} : vector<8x128xi32>
    %32 = vector.broadcast %30 : vector<8x1xi32> to vector<8x128xi32>
    %33 = arith.cmpi eq, %32, %31 : vector<8x128xi32>
    %cst_7 = arith.constant 1.000000e+00 : f32
    %cst_8 = arith.constant 0.000000e+00 : f32
    %34 = vector.broadcast %cst_7 : f32 to vector<8x128xf32>
    %35 = vector.broadcast %cst_8 : f32 to vector<8x128xf32>
    %36 = arith.select %33, %34, %35 : vector<8x128xi1>, vector<8x128xf32>
    %37 = arith.truncf %36 : vector<8x128xf32> to vector<8x128xbf16>
    %c0_9 = arith.constant 0 : index
    %c0_10 = arith.constant 0 : index
    %38 = vector.load %arg4[%c0_9, %c0_10] : memref<128x128xbf16, #tpu.memory_space<vmem>>, vector<128x128xbf16>
    %cst_11 = arith.constant dense<0.000000e+00> : vector<8x128xf32>
    %39 = tpu.matmul %37, %38, %cst_11 {dimension_numbers = #tpu.dot_dimension_numbers<[1], [0], [0], [1], [0, 0, 1, 1], [], []>} : vector<8x128xbf16>, vector<128x128xbf16>, vector<8x128xf32> -> vector<8x128xf32>
    %c0_12 = arith.constant 0 : index
    %c0_13 = arith.constant 0 : index
    %40 = vector.load %arg1[%c0_12, %c0_13] : memref<8x128xbf16, #tpu.memory_space<vmem>>, vector<8x128xbf16>
    %41 = arith.truncf %39 : vector<8x128xf32> to vector<8x128xbf16>
    %42 = arith.truncf %29 : vector<8x128xf32> to vector<8x128xbf16>
    %43 = tpu.concatenate %40, %41, %42 in 1 : vector<8x128xbf16>, vector<8x128xbf16>, vector<8x128xbf16> -> vector<8x384xbf16>
    %c0_14 = arith.constant 0 : index
    %c0_15 = arith.constant 0 : index
    %44 = vector.load %arg5[%c0_14, %c0_15] : memref<384x128xbf16, #tpu.memory_space<vmem>>, vector<384x128xbf16>
    %cst_16 = arith.constant dense<0.000000e+00> : vector<8x128xf32>
    %45 = tpu.matmul %43, %44, %cst_16 {dimension_numbers = #tpu.dot_dimension_numbers<[1], [0], [0], [1], [0, 0, 1, 1], [], []>} : vector<8x384xbf16>, vector<384x128xbf16>, vector<8x128xf32> -> vector<8x128xf32>
    %c0_17 = arith.constant 0 : index
    %c0_18 = arith.constant 0 : index
    %46 = vector.load %arg6[%c0_17, %c0_18] : memref<1x128xf32, #tpu.memory_space<vmem>>, vector<1x128xf32>
    %47 = vector.broadcast %46 : vector<1x128xf32> to vector<8x128xf32>
    %48 = arith.addf %45, %47 : vector<8x128xf32>
    %cst_19 = arith.constant 0.000000e+00 : f32
    %49 = vector.broadcast %cst_19 : f32 to vector<8x128xf32>
    %50 = arith.maximumf %48, %49 : vector<8x128xf32>
    %51 = arith.truncf %50 : vector<8x128xf32> to vector<8x128xbf16>
    %c0_20 = arith.constant 0 : index
    %c0_21 = arith.constant 0 : index
    %52 = vector.load %arg7[%c0_20, %c0_21] : memref<128x128xbf16, #tpu.memory_space<vmem>>, vector<128x128xbf16>
    %cst_22 = arith.constant dense<0.000000e+00> : vector<8x128xf32>
    %53 = tpu.matmul %51, %52, %cst_22 {dimension_numbers = #tpu.dot_dimension_numbers<[1], [0], [0], [1], [0, 0, 1, 1], [], []>} : vector<8x128xbf16>, vector<128x128xbf16>, vector<8x128xf32> -> vector<8x128xf32>
    %c0_23 = arith.constant 0 : index
    %c0_24 = arith.constant 0 : index
    %54 = vector.load %arg8[%c0_23, %c0_24] : memref<1x128xf32, #tpu.memory_space<vmem>>, vector<1x128xf32>
    %55 = vector.broadcast %54 : vector<1x128xf32> to vector<8x128xf32>
    %56 = arith.addf %53, %55 : vector<8x128xf32>
    %cst_25 = arith.constant 0.000000e+00 : f32
    %57 = vector.broadcast %cst_25 : f32 to vector<8x128xf32>
    %58 = arith.maximumf %56, %57 : vector<8x128xf32>
    %59 = arith.truncf %58 : vector<8x128xf32> to vector<8x128xbf16>
    %c0_26 = arith.constant 0 : index
    %c0_27 = arith.constant 0 : index
    %60 = vector.load %arg9[%c0_26, %c0_27] : memref<128x128xbf16, #tpu.memory_space<vmem>>, vector<128x128xbf16>
    %cst_28 = arith.constant dense<0.000000e+00> : vector<8x128xf32>
    %61 = tpu.matmul %59, %60, %cst_28 {dimension_numbers = #tpu.dot_dimension_numbers<[1], [0], [0], [1], [0, 0, 1, 1], [], []>} : vector<8x128xbf16>, vector<128x128xbf16>, vector<8x128xf32> -> vector<8x128xf32>
    %c0_29 = arith.constant 0 : index
    %c0_30 = arith.constant 0 : index
    %62 = vector.load %arg10[%c0_29, %c0_30] : memref<1x128xf32, #tpu.memory_space<vmem>>, vector<1x128xf32>
    %63 = vector.broadcast %62 : vector<1x128xf32> to vector<8x128xf32>
    %64 = arith.addf %61, %63 : vector<8x128xf32>
    %c0_31 = arith.constant 0 : index
    %c0_32 = arith.constant 0 : index
    %65 = vector.load %arg11[%c0_31, %c0_32] : memref<8x128xf32, #tpu.memory_space<vmem>>, vector<8x128xf32>
    tpu.vector_store %arg11[%c0_31, %c0_32], %64 {strides = array<i32>} : memref<8x128xf32, #tpu.memory_space<vmem>>, vector<8x128xf32>,
    return
  }
  func.func @transform_0(%arg0: i32) -> (i32, i32) {
    %c0_i32 = arith.constant 0 : i32
    %c0_i32_0 = arith.constant 0 : i32
    return %arg0, %c0_i32 : i32, i32
  }
  func.func @transform_1(%arg0: i32) -> (i32, i32) {
    %c0_i32 = arith.constant 0 : i32
    %c0_i32_0 = arith.constant 0 : i32
    return %arg0, %c0_i32 : i32, i32
  }
  func.func @transform_2(%arg0: i32) -> (i32, i32) {
    %c0_i32 = arith.constant 0 : i32
    %c0_i32_0 = arith.constant 0 : i32
    return %arg0, %c0_i32 : i32, i32
  }
  func.func @transform_3(%arg0: i32) -> (i32, i32) {
    %c0_i32 = arith.constant 0 : i32
    %c0_i32_0 = arith.constant 0 : i32
    %c0_i32_1 = arith.constant 0 : i32
    return %c0_i32, %c0_i32_0 : i32, i32
  }
  func.func @transform_4(%arg0: i32) -> (i32, i32) {
    %c0_i32 = arith.constant 0 : i32
    %c0_i32_0 = arith.constant 0 : i32
    %c0_i32_1 = arith.constant 0 : i32
    return %c0_i32, %c0_i32_0 : i32, i32
  }
  func.func @transform_5(%arg0: i32) -> (i32, i32) {
    %c0_i32 = arith.constant 0 : i32
    %c0_i32_0 = arith.constant 0 : i32
    %c0_i32_1 = arith.constant 0 : i32
    return %c0_i32, %c0_i32_0 : i32, i32
  }
  func.func @transform_6(%arg0: i32) -> (i32, i32) {
    %c0_i32 = arith.constant 0 : i32
    %c0_i32_0 = arith.constant 0 : i32
    %c0_i32_1 = arith.constant 0 : i32
    return %c0_i32, %c0_i32_0 : i32, i32
  }
  func.func @transform_7(%arg0: i32) -> (i32, i32) {
    %c0_i32 = arith.constant 0 : i32
    %c0_i32_0 = arith.constant 0 : i32
    %c0_i32_1 = arith.constant 0 : i32
    return %c0_i32, %c0_i32_0 : i32, i32
  }
  func.func @transform_8(%arg0: i32) -> (i32, i32) {
    %c0_i32 = arith.constant 0 : i32
    %c0_i32_0 = arith.constant 0 : i32
    %c0_i32_1 = arith.constant 0 : i32
    return %c0_i32, %c0_i32_0 : i32, i32
  }
  func.func @transform_9(%arg0: i32) -> (i32, i32) {
    %c0_i32 = arith.constant 0 : i32
    %c0_i32_0 = arith.constant 0 : i32
    %c0_i32_1 = arith.constant 0 : i32
    return %c0_i32, %c0_i32_0 : i32, i32
  }
  func.func @transform_10(%arg0: i32) -> (i32, i32) {
    %c0_i32 = arith.constant 0 : i32
    %c0_i32_0 = arith.constant 0 : i32
    return %arg0, %c0_i32 : i32, i32
  }
}

</mosaic_0001>

<llo_original>
// kernel: _forward_jit.1
$region0: #{_forward_jit.1}
  #allocation0 [shape = 'u32[]', space=smem, size = 0x4, offset = 0x4, fixed_abs, tag = 'smem constant byte address 0x4 - core index']
  #allocation1 [shape = 'u32[72,128]{1,0:T(1,128)}', space=vmem, size = 0x9000, scoped, tag = 'internal scratch']
  %s0 = inlined_call_operand.vmem [shape: bf16[8,128], index: 0, kind: input, shape index: {}]
  %s1 = inlined_call_operand.vmem [shape: f32[8,1], index: 1, kind: input, shape index: {}]
  %s2 = inlined_call_operand.vmem [shape: s32[8,1], index: 2, kind: input, shape index: {}]
  %s3 = inlined_call_operand.hbm [shape: bf16[128,128], index: 3, kind: input, shape index: {}]
  %s4 = inlined_call_operand.hbm [shape: bf16[384,128], index: 4, kind: input, shape index: {}]
  %s5 = inlined_call_operand.vmem [shape: f32[1,128], index: 5, kind: input, shape index: {}]
  %s6 = inlined_call_operand.hbm [shape: bf16[128,128], index: 6, kind: input, shape index: {}]
  %s7 = inlined_call_operand.vmem [shape: f32[1,128], index: 7, kind: input, shape index: {}]
  %s8 = inlined_call_operand.hbm [shape: bf16[128,128], index: 8, kind: input, shape index: {}]
  %s9 = inlined_call_operand.vmem [shape: f32[1,128], index: 9, kind: input, shape index: {}]
  %s10 = inlined_call_operand.vmem [shape: f32[8,128], index: 10, kind: output, shape index: {}]
  %s11 = sld [smem:[#allocation0]]
  $region66: #{_forward_jit.1} parent=0
    _
  %s13 = ssub.s32 1, %s11
  %s14 = scalar_select 0, %s13, %s11
  $region1: #{_forward_jit.1} parent=0
    #allocation2 [shape = 'u8[32768]{0}', space=vmem, size = 0x8000, scoped, tag = 'input window, operand 3, single buffered']
    #allocation3 [shape = 's32[1]{0}', space=sflag, size = 0x4, scoped, tag = 'scoped memory for _forward_jit.1']
    #allocation4 [shape = 'u8[98304]{0}', space=vmem, size = 0x18000, scoped, tag = 'input window, operand 4, single buffered']
    #allocation5 [shape = 's32[1]{0}', space=sflag, size = 0x4, scoped, tag = 'scoped memory for _forward_jit.1']
    #allocation6 [shape = 'u8[32768]{0}', space=vmem, size = 0x8000, scoped, tag = 'input window, operand 6, single buffered']
    #allocation7 [shape = 'u8[32768]{0}', space=vmem, size = 0x8000, scoped, tag = 'input window, operand 8, single buffered']
    #allocation8 [shape = 's32[1]{0}', space=sflag, size = 0x4, scoped, tag = 'scoped memory for _forward_jit.1']
    %15 = vsyncpa [#allocation3], 0
    %16 = vsyncpa [#allocation5], 0
    %17 = vsyncpa [#allocation8], 0
    // Predicated region
    $region2: #{_forward_jit.1} parent=1 // pred_check
      _
    $region3: #{_forward_jit.1} parent=1 // pred_check_branch
      %19 = sbr.rel (0) target = $region5
    $region4: #{_forward_jit.1} parent=1 // pred_region
      _
    $region5: #{_forward_jit.1} parent=1 // pred_fallthru
      _
    // Predicated region
    $region6: #{_forward_jit.1} parent=1 // pred_check
      _
    $region7: #{_forward_jit.1} parent=1 // pred_check_branch
      %21 = sbr.rel (0) target = $region9
    $region8: #{_forward_jit.1} parent=1 // pred_region
      _
    $region9: #{_forward_jit.1} parent=1 // pred_fallthru
      _
    // Predicated region
    $region10: #{_forward_jit.1} parent=1 // pred_check
      _
    $region11: #{_forward_jit.1} parent=1 // pred_check_branch
      %23 = sbr.rel (0) target = $region13
    $region12: #{_forward_jit.1} parent=1 // pred_region
      _
    $region13: #{_forward_jit.1} parent=1 // pred_fallthru
      _
    // Predicated region
    $region14: #{_forward_jit.1} parent=1 // pred_check
      _
    $region15: #{_forward_jit.1} parent=1 // pred_check_branch
      %25 = sbr.rel (0) target = $region17
    $region16: #{_forward_jit.1} parent=1 // pred_region
      %27 = vsyncadd [#allocation3], 0
      %s28 = sshll.u32 %s3, 4
      %s29 = int_to_ptr.hbm [resolvable:$true] %s28
      %s30 = sshll.u32 [#allocation2], 4
      %s31 = int_to_ptr.vmem [resolvable:$true] %s30
      %36 = dma.hbm_to_vmem [thread:$0]  %s29, 1024, %s31, [#allocation3], 64, 64, 4
    $region17: #{_forward_jit.1} parent=1 // pred_fallthru
      _
    // Predicated region
    $region18: #{_forward_jit.1} parent=1 // pred_check
      _
    $region19: #{_forward_jit.1} parent=1 // pred_check_branch
      %38 = sbr.rel (0) target = $region21
    $region20: #{_forward_jit.1} parent=1 // pred_region
      %40 = vsyncadd [#allocation5], 0
      %s41 = sshll.u32 %s4, 4
      %s42 = int_to_ptr.hbm [resolvable:$true] %s41
      %s43 = sshll.u32 [#allocation4], 4
      %s44 = int_to_ptr.vmem [resolvable:$true] %s43
      %49 = dma.hbm_to_vmem [thread:$0]  %s42, 3072, %s44, [#allocation5], 64, 64, 4
    $region21: #{_forward_jit.1} parent=1 // pred_fallthru
      _
    // Predicated region
    $region22: #{_forward_jit.1} parent=1 // pred_check
      _
    $region23: #{_forward_jit.1} parent=1 // pred_check_branch
      %51 = sbr.rel (0) target = $region25
    $region24: #{_forward_jit.1} parent=1 // pred_region
      _
    $region25: #{_forward_jit.1} parent=1 // pred_fallthru
      _
    // Predicated region
    $region26: #{_forward_jit.1} parent=1 // pred_check
      _
    $region27: #{_forward_jit.1} parent=1 // pred_check_branch
      %53 = sbr.rel (0) target = $region29
    $region28: #{_forward_jit.1} parent=1 // pred_region
      %55 = vsyncadd [#allocation5], 0
      %s56 = sshll.u32 %s6, 4
      %s57 = int_to_ptr.hbm [resolvable:$true] %s56
      %s58 = sshll.u32 [#allocation6], 4
      %s59 = int_to_ptr.vmem [resolvable:$true] %s58
      %64 = dma.hbm_to_vmem [thread:$0]  %s57, 1024, %s59, [#allocation5], 64, 64, 4
    $region29: #{_forward_jit.1} parent=1 // pred_fallthru
      _
    // Predicated region
    $region30: #{_forward_jit.1} parent=1 // pred_check
      _
    $region31: #{_forward_jit.1} parent=1 // pred_check_branch
      %66 = sbr.rel (0) target = $region33
    $region32: #{_forward_jit.1} parent=1 // pred_region
      _
    $region33: #{_forward_jit.1} parent=1 // pred_fallthru
      _
    // Predicated region
    $region34: #{_forward_jit.1} parent=1 // pred_check
      _
    $region35: #{_forward_jit.1} parent=1 // pred_check_branch
      %68 = sbr.rel (0) target = $region37
    $region36: #{_forward_jit.1} parent=1 // pred_region
      %70 = vsyncadd [#allocation8], 0
      %s71 = sshll.u32 %s8, 4
      %s72 = int_to_ptr.hbm [resolvable:$true] %s71
      %s73 = sshll.u32 [#allocation7], 4
      %s74 = int_to_ptr.vmem [resolvable:$true] %s73
      %79 = dma.hbm_to_vmem [thread:$0]  %s72, 1024, %s74, [#allocation8], 64, 64, 4
    $region37: #{_forward_jit.1} parent=1 // pred_fallthru
      _
    // Predicated region
    $region38: #{_forward_jit.1} parent=1 // pred_check
      _
    $region39: #{_forward_jit.1} parent=1 // pred_check_branch
      %81 = sbr.rel (0) target = $region41
    $region40: #{_forward_jit.1} parent=1 // pred_region
      _
    $region41: #{_forward_jit.1} parent=1 // pred_fallthru
      _
    // Predicated region
    $region42: #{_forward_jit.1} parent=1 // pred_check
      _
    $region43: #{_forward_jit.1} parent=1 // pred_check_branch
      %83 = sbr.rel (0) target = $region45
    $region44: #{_forward_jit.1} parent=1 // pred_region
      %85 = dma.done [#allocation3], 1024
    $region45: #{_forward_jit.1} parent=1 // pred_fallthru
      _
    // Predicated region
    $region46: #{_forward_jit.1} parent=1 // pred_check
      _
    $region47: #{_forward_jit.1} parent=1 // pred_check_branch
      %87 = sbr.rel (0) target = $region49
    $region48: #{_forward_jit.1} parent=1 // pred_region
      %89 = dma.done [#allocation5], 3072
    $region49: #{_forward_jit.1} parent=1 // pred_fallthru
      _
    // Predicated region
    $region50: #{_forward_jit.1} parent=1 // pred_check
      _
    $region51: #{_forward_jit.1} parent=1 // pred_check_branch
      %91 = sbr.rel (0) target = $region53
    $region52: #{_forward_jit.1} parent=1 // pred_region
      %93 = dma.done [#allocation5], 1024
    $region53: #{_forward_jit.1} parent=1 // pred_fallthru
      _
    // Predicated region
    $region54: #{_forward_jit.1} parent=1 // pred_check
      _
    $region55: #{_forward_jit.1} parent=1 // pred_check_branch
      %95 = sbr.rel (0) target = $region57
    $region56: #{_forward_jit.1} parent=1 // pred_region
      %97 = dma.done [#allocation8], 1024
    $region57: #{_forward_jit.1} parent=1 // pred_fallthru
      _
    %v98 = vld [vmem:[%s1] sm:$0xff]
    %v99 = vlaneseq
    %v100 = vand.u32 %v99, 127
    %vm101 = vcmp.lt.s32.totalorder %v100, 2
    %vm102 = vcmp.ge.s32.totalorder %v100, 2
    %vm103 = vcmp.lt.s32.totalorder %v100, 4
    %vm104 = vmand %vm102, %vm103
    %v105 = vsub.s32 %v100, 2
    %v106 = vsel %vm101, %v100, %v105
    %v107 = vcvt.s32.f32 %v106
    %v108 = vmul.f32 %v107, -4.6051702
    %v109 = vmul.f32 %v108, 1.442695
    %v110 = vpow.pop %v109
    %112 = vset.pattern.permute.xlu0 0
    %113 = vperm.xlu0 %112, %v98
    %v114 = vpop.permute.xlu0 %113
    %v116 = vmul.f32 %v114, %v110
    %v117 = vand.u32 2147483647, %v116
    %vm118 = vcmp.le.f32.partialorder %v117, 0.7853982
    %vm119 = vcmp.lt.s32.totalorder %v116, 0
    %v120 = vand.u32 %v116, 2139095040
    %v121 = vshrl.u32 %v120, 23
    %v122 = vsub.s32 %v121, 127
    %v123 = vand.u32 2147483647, %v116
    %v124 = vand.u32 %v123, 8388607
    %v125 = vor.u32 %v124, 8388608
    %v126 = vsub.s32 0, %v125
    %v127 = vadd.s32 %v122, 1
    %vm128 = vcmp.gt.s32.totalorder %v127, 0
    %v129 = vsel %vm128, %v127, 0
    %v130 = vshrl.u32 %v129, 5
    %v131 = vand.u32 %v129, 31
    %v132 = vsub.s32 32, %v131
    %v133 = vshrl.u32 683565275, %v132
    %v134 = vshll.u32 683565275, %v131
    %v135 = vshrl.u32 2475754826, %v132
    %v136 = vor.u32 %v134, %v135
    %v137 = vshll.u32 2475754826, %v131
    %v138 = vshrl.u32 2131351028, %v132
    %v139 = vor.u32 %v137, %v138
    %v140 = vshll.u32 2131351028, %v131
    %v141 = vshrl.u32 2102212464, %v132
    %v142 = vor.u32 %v140, %v141
    %v143 = vshll.u32 2102212464, %v131
    %v144 = vshrl.u32 920167782, %v132
    %v145 = vor.u32 %v143, %v144
    %v146 = vshll.u32 920167782, %v131
    %v147 = vshrl.u32 1326507024, %v132
    %v148 = vor.u32 %v146, %v147
    %vm149 = vcmp.lt.s32.totalorder %v130, 1
    %vm150 = vcmp.lt.s32.totalorder %v130, 2
    %vm151 = vcmp.lt.s32.totalorder %v130, 3
    %vm152 = vcmp.lt.s32.totalorder %v130, 4
    %v153 = vsel %vm149, %v133, %v136
    %v154 = vsel %vm152, %v142, 2102212464
    %v155 = vsel %vm151, %v139, %v154
    %v156 = vsel %vm150, %v153, %v155
    %v157 = vsel %vm149, %v136, %v139
    %v158 = vsel %vm152, %v145, 920167782
    %v159 = vsel %vm151, %v142, %v158
    %v160 = vsel %vm150, %v157, %v159
    %v161 = vsel %vm149, %v139, %v142
    %v162 = vsel %vm152, %v148, 1326507024
    %v163 = vsel %vm151, %v145, %v162
    %v164 = vsel %vm150, %v161, %v163
    %v165 = vshll.u32 %v125, 8
    %v166 = vand.u32 %v165, 65535
    %v167 = vshrl.u32 %v165, 16
    %v168 = vand.u32 %v164, 65535
    %v169 = vshrl.u32 %v164, 16
    %v170 = vmul.u32 %v166, %v168
    %v171 = vmul.u32 %v166, %v169
    %v172 = vmul.u32 %v167, %v168
    %v173 = vmul.u32 %v167, %v169
    %v174 = vshll.u32 %v171, 16
    %v175 = vshrl.u32 %v171, 16
    %v176 = vshll.u32 %v172, 16
    %v177 = vshrl.u32 %v172, 16
    %vm178 = vc.u32 %v170, %v174
    %v179 = vsel %vm178, 1, 0
    %v180 = vadd.s32 %v170, %v174
    %v181 = vadd.s32 %v173, %v179
    %vm182 = vc.u32 %v180, %v176
    %v183 = vsel %vm182, 1, 0
    %v184 = vadd.s32 %v180, %v176
    %v185 = vadd.s32 %v181, %v183
    %v186 = vadd.s32 %v185, %v175
    %v187 = vadd.s32 %v186, %v177
    %v188 = vand.u32 %v165, 65535
    %v189 = vshrl.u32 %v165, 16
    %v190 = vand.u32 %v160, 65535
    %v191 = vshrl.u32 %v160, 16
    %v192 = vmul.u32 %v188, %v190
    %v193 = vmul.u32 %v188, %v191
    %v194 = vmul.u32 %v189, %v190
    %v195 = vmul.u32 %v189, %v191
    %v196 = vshll.u32 %v193, 16
    %v197 = vshrl.u32 %v193, 16
    %v198 = vshll.u32 %v194, 16
    %v199 = vshrl.u32 %v194, 16
    %vm200 = vc.u32 %v192, %v196
    %v201 = vsel %vm200, 1, 0
    %v202 = vadd.s32 %v192, %v196
    %v203 = vadd.s32 %v195, %v201
    %vm204 = vc.u32 %v202, %v198
    %v205 = vsel %vm204, 1, 0
    %v206 = vadd.s32 %v202, %v198
    %v207 = vadd.s32 %v203, %v205
    %v208 = vadd.s32 %v207, %v197
    %v209 = vadd.s32 %v208, %v199
    %v210 = vmul.u32 %v165, %v156
    %v211 = vadd.s32 %v187, %v206
    %vm212 = vc.u32 %v187, %v206
    %v213 = vadd.s32 %v209, 1
    %v214 = vsel %vm212, %v213, %v209
    %v215 = vadd.s32 %v210, %v214
    %v216 = vadd.s32 %v215, 536870912
    %v217 = vshrl.u32 %v216, 30
    %v218 = vshll.u32 %v217, 30
    %v219 = vsub.s32 %v215, %v218
    %vm220 = vcmp.lt.s32.totalorder %v219, 0
    %v221 = vsub.s32 0, %v219
    %v222 = vsel %vm220, %v221, %v219
    %v223 = vclz %v222
    %v224 = vsub.s32 %v223, 2
    %vm225 = vcmp.gt.s32.totalorder 0, %v224
    %v226 = vsel %vm225, 0, %v224
    %v227 = vsub.s32 32, %v226
    %v228 = vshll.u32 %v219, %v226
    %v229 = vshrl.u32 %v211, %v227
    %v230 = vor.u32 %v228, %v229
    %v231 = vsub.s32 4294967266, %v226
    %v232 = vadd.s32 %v231, 127
    %v233 = vshll.u32 %v232, 23
    %v234 = vor.u32 4788187, %v233
    %v235 = vand.u32 2147483647, %v234
    %v237 = vcvt.s32.f32 %v230
    %v238 = vmul.f32 %v237, %v235
    %v239 = vxor.u32 %v238, 2147483648
    %v240 = vsel %vm119, %v239, %v238
    %v241 = vsub.s32 4, %v217
    %v242 = vsel %vm119, %v241, %v217
    %v243 = vsel %vm118, %v116, %v240
    %v244 = vsel %vm118, 0, %v242
    %v245 = vmul.f32 %v243, %v243
    %v246 = vmul.f32 %v245, -0.001358992
    %v247 = vadd.f32 %v246, 0.041655596
    %v248 = vmul.f32 %v245, %v247
    %v249 = vadd.f32 %v248, -0.4999988
    %v250 = vmul.f32 %v245, %v249
    %v251 = vadd.f32 1.0, %v250
    %v252 = vmul.f32 %v243, %v243
    %v253 = vmul.f32 %v252, -0.00019511016
    %v254 = vadd.f32 %v253, 0.008332121
    %v255 = vmul.f32 %v252, %v254
    %v256 = vadd.f32 %v255, -0.16666654
    %v257 = vmul.f32 %v252, %v256
    %v258 = vadd.f32 %v257, 1.0
    %v259 = vmul.f32 %v258, %v243
    %vm260 = vweird.f32 %v116
    %v261 = vadd.s32 %v244, 3
    %v262 = vand.u32 %v261, 3
    %vm263 = vcmp.lt.s32.totalorder %v262, 2
    %vm264 = vcmp.eq.s32.totalorder %v262, 0
    %v265 = vxor.u32 %v259, 2147483648
    %v266 = vsel %vm264, %v251, %v265
    %vm267 = vcmp.eq.s32.totalorder %v262, 2
    %v268 = vxor.u32 %v251, 2147483648
    %v269 = vsel %vm267, %v268, %v259
    %v270 = vsel %vm263, %v266, %v269
    %v271 = vsel %vm260, nan, %v270
    %v272 = vsel %vm101, 1, 0
    %vm273 = vcmp.eq.s32.totalorder %v272, 1
    %v274 = vsel %vm273, %v271, 0.0
    %v275 = vand.u32 2147483647, %v116
    %vm276 = vcmp.le.f32.partialorder %v275, 0.7853982
    %vm277 = vcmp.lt.s32.totalorder %v116, 0
    %v278 = vand.u32 %v116, 2139095040
    %v279 = vshrl.u32 %v278, 23
    %v280 = vsub.s32 %v279, 127
    %v281 = vand.u32 2147483647, %v116
    %v282 = vand.u32 %v281, 8388607
    %v283 = vor.u32 %v282, 8388608
    %v284 = vsub.s32 0, %v283
    %v285 = vadd.s32 %v280, 1
    %vm286 = vcmp.gt.s32.totalorder %v285, 0
    %v287 = vsel %vm286, %v285, 0
    %v288 = vshrl.u32 %v287, 5
    %v289 = vand.u32 %v287, 31
    %v290 = vsub.s32 32, %v289
    %v291 = vshrl.u32 683565275, %v290
    %v292 = vshll.u32 683565275, %v289
    %v293 = vshrl.u32 2475754826, %v290
    %v294 = vor.u32 %v292, %v293
    %v295 = vshll.u32 2475754826, %v289
    %v296 = vshrl.u32 2131351028, %v290
    %v297 = vor.u32 %v295, %v296
    %v298 = vshll.u32 2131351028, %v289
    %v299 = vshrl.u32 2102212464, %v290
    %v300 = vor.u32 %v298, %v299
    %v301 = vshll.u32 2102212464, %v289
    %v302 = vshrl.u32 920167782, %v290
    %v303 = vor.u32 %v301, %v302
    %v304 = vshll.u32 920167782, %v289
    %v305 = vshrl.u32 1326507024, %v290
    %v306 = vor.u32 %v304, %v305
    %vm307 = vcmp.lt.s32.totalorder %v288, 1
    %vm308 = vcmp.lt.s32.totalorder %v288, 2
    %vm309 = vcmp.lt.s32.totalorder %v288, 3
    %vm310 = vcmp.lt.s32.totalorder %v288, 4
    %v311 = vsel %vm307, %v291, %v294
    %v312 = vsel %vm310, %v300, 2102212464
    %v313 = vsel %vm309, %v297, %v312
    %v314 = vsel %vm308, %v311, %v313
    %v315 = vsel %vm307, %v294, %v297
    %v316 = vsel %vm310, %v303, 920167782
    %v317 = vsel %vm309, %v300, %v316
    %v318 = vsel %vm308, %v315, %v317
    %v319 = vsel %vm307, %v297, %v300
    %v320 = vsel %vm310, %v306, 1326507024
    %v321 = vsel %vm309, %v303, %v320
    %v322 = vsel %vm308, %v319, %v321
    %v323 = vshll.u32 %v283, 8
    %v324 = vand.u32 %v323, 65535
    %v325 = vshrl.u32 %v323, 16
    %v326 = vand.u32 %v322, 65535
    %v327 = vshrl.u32 %v322, 16
    %v328 = vmul.u32 %v324, %v326
    %v329 = vmul.u32 %v324, %v327
    %v330 = vmul.u32 %v325, %v326
    %v331 = vmul.u32 %v325, %v327
    %v332 = vshll.u32 %v329, 16
    %v333 = vshrl.u32 %v329, 16
    %v334 = vshll.u32 %v330, 16
    %v335 = vshrl.u32 %v330, 16
    %vm336 = vc.u32 %v328, %v332
    %v337 = vsel %vm336, 1, 0
    %v338 = vadd.s32 %v328, %v332
    %v339 = vadd.s32 %v331, %v337
    %vm340 = vc.u32 %v338, %v334
    %v341 = vsel %vm340, 1, 0
    %v342 = vadd.s32 %v338, %v334
    %v343 = vadd.s32 %v339, %v341
    %v344 = vadd.s32 %v343, %v333
    %v345 = vadd.s32 %v344, %v335
    %v346 = vand.u32 %v323, 65535
    %v347 = vshrl.u32 %v323, 16
    %v348 = vand.u32 %v318, 65535
    %v349 = vshrl.u32 %v318, 16
    %v350 = vmul.u32 %v346, %v348
    %v351 = vmul.u32 %v346, %v349
    %v352 = vmul.u32 %v347, %v348
    %v353 = vmul.u32 %v347, %v349
    %v354 = vshll.u32 %v351, 16
    %v355 = vshrl.u32 %v351, 16
    %v356 = vshll.u32 %v352, 16
    %v357 = vshrl.u32 %v352, 16
    %vm358 = vc.u32 %v350, %v354
    %v359 = vsel %vm358, 1, 0
    %v360 = vadd.s32 %v350, %v354
    %v361 = vadd.s32 %v353, %v359
    %vm362 = vc.u32 %v360, %v356
    %v363 = vsel %vm362, 1, 0
    %v364 = vadd.s32 %v360, %v356
    %v365 = vadd.s32 %v361, %v363
    %v366 = vadd.s32 %v365, %v355
    %v367 = vadd.s32 %v366, %v357
    %v368 = vmul.u32 %v323, %v314
    %v369 = vadd.s32 %v345, %v364
    %vm370 = vc.u32 %v345, %v364
    %v371 = vadd.s32 %v367, 1
    %v372 = vsel %vm370, %v371, %v367
    %v373 = vadd.s32 %v368, %v372
    %v374 = vadd.s32 %v373, 536870912
    %v375 = vshrl.u32 %v374, 30
    %v376 = vshll.u32 %v375, 30
    %v377 = vsub.s32 %v373, %v376
    %vm378 = vcmp.lt.s32.totalorder %v377, 0
    %v379 = vsub.s32 0, %v377
    %v380 = vsel %vm378, %v379, %v377
    %v381 = vclz %v380
    %v382 = vsub.s32 %v381, 2
    %vm383 = vcmp.gt.s32.totalorder 0, %v382
    %v384 = vsel %vm383, 0, %v382
    %v385 = vsub.s32 32, %v384
    %v386 = vshll.u32 %v377, %v384
    %v387 = vshrl.u32 %v369, %v385
    %v388 = vor.u32 %v386, %v387
    %v389 = vsub.s32 4294967266, %v384
    %v390 = vadd.s32 %v389, 127
    %v391 = vshll.u32 %v390, 23
    %v392 = vor.u32 4788187, %v391
    %v393 = vand.u32 2147483647, %v392
    %v395 = vcvt.s32.f32 %v388
    %v396 = vmul.f32 %v395, %v393
    %v397 = vxor.u32 %v396, 2147483648
    %v398 = vsel %vm277, %v397, %v396
    %v399 = vsub.s32 4, %v375
    %v400 = vsel %vm277, %v399, %v375
    %v401 = vsel %vm276, %v116, %v398
    %v402 = vsel %vm276, 0, %v400
    %v403 = vmul.f32 %v401, %v401
    %v404 = vmul.f32 %v403, -0.001358992
    %v405 = vadd.f32 %v404, 0.041655596
    %v406 = vmul.f32 %v403, %v405
    %v407 = vadd.f32 %v406, -0.4999988
    %v408 = vmul.f32 %v403, %v407
    %v409 = vadd.f32 1.0, %v408
    %v410 = vmul.f32 %v401, %v401
    %v411 = vmul.f32 %v410, -0.00019511016
    %v412 = vadd.f32 %v411, 0.008332121
    %v413 = vmul.f32 %v410, %v412
    %v414 = vadd.f32 %v413, -0.16666654
    %v415 = vmul.f32 %v410, %v414
    %v416 = vadd.f32 %v415, 1.0
    %v417 = vmul.f32 %v416, %v401
    %vm418 = vweird.f32 %v116
    %v419 = vand.u32 %v402, 3
    %vm420 = vcmp.lt.s32.totalorder %v419, 2
    %vm421 = vcmp.eq.s32.totalorder %v419, 0
    %v422 = vxor.u32 %v417, 2147483648
    %v423 = vsel %vm421, %v409, %v422
    %vm424 = vcmp.eq.s32.totalorder %v419, 2
    %v425 = vxor.u32 %v409, 2147483648
    %v426 = vsel %vm424, %v425, %v417
    %v427 = vsel %vm420, %v423, %v426
    %v428 = vsel %vm418, nan, %v427
    %v429 = vsel %vm104, 1, 0
    %vm430 = vcmp.eq.s32.totalorder %v429, 1
    %v431 = vsel %vm430, %v428, 0.0
    %v432 = vadd.f32 %v274, %v431
    %v433 = vld [vmem:[%s2] sm:$0xff]
    %434 = vset.pattern.permute.xlu0 0
    %435 = vperm.xlu0 %434, %v433
    %v436 = vpop.permute.xlu0 %435
    %vm437 = vcmp.eq.s32.totalorder %v436, %v100
    %v438 = vsel %vm437, 1.0, 0.0
    %v439 = vpack.c.bf16 %v438, %v438
    %v440 = vld [vmem:[#allocation2] sm:$0xf]
    %v441 = vld [vmem:[#allocation2 + $0x4] sm:$0xf]
    %v442 = vld [vmem:[#allocation2 + $0x8] sm:$0xf]
    %v443 = vld [vmem:[#allocation2 + $0xc] sm:$0xf]
    %v444 = vld [vmem:[#allocation2 + $0x10] sm:$0xf]
    %v445 = vld [vmem:[#allocation2 + $0x14] sm:$0xf]
    %v446 = vld [vmem:[#allocation2 + $0x18] sm:$0xf]
    %v447 = vld [vmem:[#allocation2 + $0x1c] sm:$0xf]
    %v448 = vld [vmem:[#allocation2 + $0x20] sm:$0xf]
    %v449 = vld [vmem:[#allocation2 + $0x24] sm:$0xf]
    %v450 = vld [vmem:[#allocation2 + $0x28] sm:$0xf]
    %v451 = vld [vmem:[#allocation2 + $0x2c] sm:$0xf]
    %v452 = vld [vmem:[#allocation2 + $0x30] sm:$0xf]
    %v453 = vld [vmem:[#allocation2 + $0x34] sm:$0xf]
    %v454 = vld [vmem:[#allocation2 + $0x38] sm:$0xf]
    %v455 = vld [vmem:[#allocation2 + $0x3c] sm:$0xf]
    %v472 = vunpack.c.l.b16 %v440
    %v473 = vunpack.c.l.b16 %v441
    %v474 = vunpack.c.l.b16 %v442
    %v475 = vunpack.c.l.b16 %v443
    %v476 = vunpack.c.l.b16 %v444
    %v477 = vunpack.c.l.b16 %v445
    %v478 = vunpack.c.l.b16 %v446
    %v479 = vunpack.c.l.b16 %v447
    %v480 = vunpack.c.l.b16 %v448
    %v481 = vunpack.c.l.b16 %v449
    %v482 = vunpack.c.l.b16 %v450
    %v483 = vunpack.c.l.b16 %v451
    %v484 = vunpack.c.l.b16 %v452
    %v485 = vunpack.c.l.b16 %v453
    %v486 = vunpack.c.l.b16 %v454
    %v487 = vunpack.c.l.b16 %v455
    %v488 = vpack.c.b16 %v473, %v472
    %v489 = vpack.c.b16 %v475, %v474
    %v490 = vpack.c.b16 %v477, %v476
    %v491 = vpack.c.b16 %v479, %v478
    %v492 = vpack.c.b16 %v481, %v480
    %v493 = vpack.c.b16 %v483, %v482
    %v494 = vpack.c.b16 %v485, %v484
    %v495 = vpack.c.b16 %v487, %v486
    %504 = vmatpush.bf16.msra.mxu0 %v495
    %505 = vmatpush.bf16.msra.mxu0 %v494
    %506 = vmatpush.bf16.msra.mxu0 %v493
    %507 = vmatpush.bf16.msra.mxu0 %v492
    %508 = vmatpush.bf16.msra.mxu0 %v491
    %509 = vmatpush.bf16.msra.mxu0 %v490
    %510 = vmatpush.bf16.msra.mxu0 %v489
    %511 = vmatpush.bf16.msra.mxu0 %v488
    %512 = vmatmul.bf16.gmra.mxu0 %v439
    %v513 = vpop.f32.mrf.mxu0
    %v514 = vadd.f32 0.0, %v513
    %v515 = vpop.f32.mrf.mxu0
    %516 = vdwg.mxu0
    %v517 = vld [vmem:[%s0] sm:$0xf]
    %v518 = vpack.c.bf16 %v514, %v514
    %v519 = vpack.c.bf16 %v432, %v432
    %v520 = vld [vmem:[#allocation4] sm:$0xf]
    %v521 = vld [vmem:[#allocation4 + $0x4] sm:$0xf]
    %v522 = vld [vmem:[#allocation4 + $0x8] sm:$0xf]
    %v523 = vld [vmem:[#allocation4 + $0xc] sm:$0xf]
    %v524 = vld [vmem:[#allocation4 + $0x10] sm:$0xf]
    %v525 = vld [vmem:[#allocation4 + $0x14] sm:$0xf]
    %v526 = vld [vmem:[#allocation4 + $0x18] sm:$0xf]
    %v527 = vld [vmem:[#allocation4 + $0x1c] sm:$0xf]
    %v528 = vld [vmem:[#allocation4 + $0x20] sm:$0xf]
    %v529 = vld [vmem:[#allocation4 + $0x24] sm:$0xf]
    %v530 = vld [vmem:[#allocation4 + $0x28] sm:$0xf]
    %v531 = vld [vmem:[#allocation4 + $0x2c] sm:$0xf]
    %v532 = vld [vmem:[#allocation4 + $0x30] sm:$0xf]
    %v533 = vld [vmem:[#allocation4 + $0x34] sm:$0xf]
    %v534 = vld [vmem:[#allocation4 + $0x38] sm:$0xf]
    %v535 = vld [vmem:[#allocation4 + $0x3c] sm:$0xf]
    %v536 = vld [vmem:[#allocation4 + $0x40] sm:$0xf]
    %v537 = vld [vmem:[#allocation4 + $0x44] sm:$0xf]
    %v538 = vld [vmem:[#allocation4 + $0x48] sm:$0xf]
    %v539 = vld [vmem:[#allocation4 + $0x4c] sm:$0xf]
    %v540 = vld [vmem:[#allocation4 + $0x50] sm:$0xf]
    %v541 = vld [vmem:[#allocation4 + $0x54] sm:$0xf]
    %v542 = vld [vmem:[#allocation4 + $0x58] sm:$0xf]
    %v543 = vld [vmem:[#allocation4 + $0x5c] sm:$0xf]
    %v544 = vld [vmem:[#allocation4 + $0x60] sm:$0xf]
    %v545 = vld [vmem:[#allocation4 + $0x64] sm:$0xf]
    %v546 = vld [vmem:[#allocation4 + $0x68] sm:$0xf]
    %v547 = vld [vmem:[#allocation4 + $0x6c] sm:$0xf]
    %v548 = vld [vmem:[#allocation4 + $0x70] sm:$0xf]
    %v549 = vld [vmem:[#allocation4 + $0x74] sm:$0xf]
    %v550 = vld [vmem:[#allocation4 + $0x78] sm:$0xf]
    %v551 = vld [vmem:[#allocation4 + $0x7c] sm:$0xf]
    %v552 = vld [vmem:[#allocation4 + $0x80] sm:$0xf]
    %v553 = vld [vmem:[#allocation4 + $0x84] sm:$0xf]
    %v554 = vld [vmem:[#allocation4 + $0x88] sm:$0xf]
    %v555 = vld [vmem:[#allocation4 + $0x8c] sm:$0xf]
    %v556 = vld [vmem:[#allocation4 + $0x90] sm:$0xf]
    %v557 = vld [vmem:[#allocation4 + $0x94] sm:$0xf]
    %v558 = vld [vmem:[#allocation4 + $0x98] sm:$0xf]
    %v559 = vld [vmem:[#allocation4 + $0x9c] sm:$0xf]
    %v560 = vld [vmem:[#allocation4 + $0xa0] sm:$0xf]
    %v561 = vld [vmem:[#allocation4 + $0xa4] sm:$0xf]
    %v562 = vld [vmem:[#allocation4 + $0xa8] sm:$0xf]
    %v563 = vld [vmem:[#allocation4 + $0xac] sm:$0xf]
    %v564 = vld [vmem:[#allocation4 + $0xb0] sm:$0xf]
    %v565 = vld [vmem:[#allocation4 + $0xb4] sm:$0xf]
    %v566 = vld [vmem:[#allocation4 + $0xb8] sm:$0xf]
    %v567 = vld [vmem:[#allocation4 + $0xbc] sm:$0xf]
    %v568 = vld [vmem:[%s5] sm:$0x1]
    %v570 = vperm.slane %v568, 0
    %v620 = vunpack.c.l.b16 %v520
    %v621 = vunpack.c.l.b16 %v521
    %v622 = vunpack.c.l.b16 %v522
    %v623 = vunpack.c.l.b16 %v523
    %v624 = vunpack.c.l.b16 %v524
    %v625 = vunpack.c.l.b16 %v525
    %v626 = vunpack.c.l.b16 %v526
    %v627 = vunpack.c.l.b16 %v527
    %v628 = vunpack.c.l.b16 %v528
    %v629 = vunpack.c.l.b16 %v529
    %v630 = vunpack.c.l.b16 %v530
    %v631 = vunpack.c.l.b16 %v531
    %v632 = vunpack.c.l.b16 %v532
    %v633 = vunpack.c.l.b16 %v533
    %v634 = vunpack.c.l.b16 %v534
    %v635 = vunpack.c.l.b16 %v535
    %v636 = vunpack.c.l.b16 %v536
    %v637 = vunpack.c.l.b16 %v537
    %v638 = vunpack.c.l.b16 %v538
    %v639 = vunpack.c.l.b16 %v539
    %v640 = vunpack.c.l.b16 %v540
    %v641 = vunpack.c.l.b16 %v541
    %v642 = vunpack.c.l.b16 %v542
    %v643 = vunpack.c.l.b16 %v543
    %v644 = vunpack.c.l.b16 %v544
    %v645 = vunpack.c.l.b16 %v545
    %v646 = vunpack.c.l.b16 %v546
    %v647 = vunpack.c.l.b16 %v547
    %v648 = vunpack.c.l.b16 %v548
    %v649 = vunpack.c.l.b16 %v549
    %v650 = vunpack.c.l.b16 %v550
    %v651 = vunpack.c.l.b16 %v551
    %v652 = vunpack.c.l.b16 %v552
    %v653 = vunpack.c.l.b16 %v553
    %v654 = vunpack.c.l.b16 %v554
    %v655 = vunpack.c.l.b16 %v555
    %v656 = vunpack.c.l.b16 %v556
    %v657 = vunpack.c.l.b16 %v557
    %v658 = vunpack.c.l.b16 %v558
    %v659 = vunpack.c.l.b16 %v559
    %v660 = vunpack.c.l.b16 %v560
    %v661 = vunpack.c.l.b16 %v561
    %v662 = vunpack.c.l.b16 %v562
    %v663 = vunpack.c.l.b16 %v563
    %v664 = vunpack.c.l.b16 %v564
    %v665 = vunpack.c.l.b16 %v565
    %v666 = vunpack.c.l.b16 %v566
    %v667 = vunpack.c.l.b16 %v567
    %v668 = vpack.c.b16 %v621, %v620
    %v669 = vpack.c.b16 %v623, %v622
    %v670 = vpack.c.b16 %v625, %v624
    %v671 = vpack.c.b16 %v627, %v626
    %v672 = vpack.c.b16 %v629, %v628
    %v673 = vpack.c.b16 %v631, %v630
    %v674 = vpack.c.b16 %v633, %v632
    %v675 = vpack.c.b16 %v635, %v634
    %v676 = vpack.c.b16 %v637, %v636
    %v677 = vpack.c.b16 %v639, %v638
    %v678 = vpack.c.b16 %v641, %v640
    %v679 = vpack.c.b16 %v643, %v642
    %v680 = vpack.c.b16 %v645, %v644
    %v681 = vpack.c.b16 %v647, %v646
    %v682 = vpack.c.b16 %v649, %v648
    %v683 = vpack.c.b16 %v651, %v650
    %v684 = vpack.c.b16 %v653, %v652
    %v685 = vpack.c.b16 %v655, %v654
    %v686 = vpack.c.b16 %v657, %v656
    %v687 = vpack.c.b16 %v659, %v658
    %v688 = vpack.c.b16 %v661, %v660
    %v689 = vpack.c.b16 %v663, %v662
    %v690 = vpack.c.b16 %v665, %v664
    %v691 = vpack.c.b16 %v667, %v666
    %716 = vmatpush.bf16.msra.mxu0 %v675
    %717 = vmatpush.bf16.msra.mxu0 %v674
    %718 = vmatpush.bf16.msra.mxu0 %v673
    %719 = vmatpush.bf16.msra.mxu0 %v672
    %720 = vmatpush.bf16.msra.mxu0 %v671
    %721 = vmatpush.bf16.msra.mxu0 %v670
    %722 = vmatpush.bf16.msra.mxu0 %v669
    %723 = vmatpush.bf16.msra.mxu0 %v668
    %724 = vmatmul.bf16.gmra.mxu0 %v517
    %v725 = vpop.f32.mrf.mxu0
    %v726 = vadd.f32 %v570, %v725
    %v727 = vpop.f32.mrf.mxu0
    %728 = vdwg.mxu0
    %729 = vmatpush.bf16.msra.mxu0 %v683
    %730 = vmatpush.bf16.msra.mxu0 %v682
    %731 = vmatpush.bf16.msra.mxu0 %v681
    %732 = vmatpush.bf16.msra.mxu0 %v680
    %733 = vmatpush.bf16.msra.mxu0 %v679
    %734 = vmatpush.bf16.msra.mxu0 %v678
    %735 = vmatpush.bf16.msra.mxu0 %v677
    %736 = vmatpush.bf16.msra.mxu0 %v676
    %737 = vmatmul.bf16.gmra.mxu0 %v518
    %v738 = vpop.f32.mrf.mxu0
    %v739 = vadd.f32 %v726, %v738
    %v740 = vpop.f32.mrf.mxu0
    %741 = vdwg.mxu0
    %742 = vmatpush.bf16.msra.mxu0 %v691
    %743 = vmatpush.bf16.msra.mxu0 %v690
    %744 = vmatpush.bf16.msra.mxu0 %v689
    %745 = vmatpush.bf16.msra.mxu0 %v688
    %746 = vmatpush.bf16.msra.mxu0 %v687
    %747 = vmatpush.bf16.msra.mxu0 %v686
    %748 = vmatpush.bf16.msra.mxu0 %v685
    %749 = vmatpush.bf16.msra.mxu0 %v684
    %750 = vmatmul.bf16.gmra.mxu0 %v519
    %v751 = vpop.f32.mrf.mxu0
    %v752 = vadd.f32 %v739, %v751
    %v753 = vpop.f32.mrf.mxu0
    %754 = vdwg.mxu0
    %v755 = vmax.f32 %v752, 0.0
    %v756 = vpack.c.bf16 %v755, %v755
    %v757 = vld [vmem:[#allocation6] sm:$0xf]
    %v758 = vld [vmem:[#allocation6 + $0x4] sm:$0xf]
    %v759 = vld [vmem:[#allocation6 + $0x8] sm:$0xf]
    %v760 = vld [vmem:[#allocation6 + $0xc] sm:$0xf]
    %v761 = vld [vmem:[#allocation6 + $0x10] sm:$0xf]
    %v762 = vld [vmem:[#allocation6 + $0x14] sm:$0xf]
    %v763 = vld [vmem:[#allocation6 + $0x18] sm:$0xf]
    %v764 = vld [vmem:[#allocation6 + $0x1c] sm:$0xf]
    %v765 = vld [vmem:[#allocation6 + $0x20] sm:$0xf]
    %v766 = vld [vmem:[#allocation6 + $0x24] sm:$0xf]
    %v767 = vld [vmem:[#allocation6 + $0x28] sm:$0xf]
    %v768 = vld [vmem:[#allocation6 + $0x2c] sm:$0xf]
    %v769 = vld [vmem:[#allocation6 + $0x30] sm:$0xf]
    %v770 = vld [vmem:[#allocation6 + $0x34] sm:$0xf]
    %v771 = vld [vmem:[#allocation6 + $0x38] sm:$0xf]
    %v772 = vld [vmem:[#allocation6 + $0x3c] sm:$0xf]
    %v773 = vld [vmem:[%s7] sm:$0x1]
    %v775 = vperm.slane %v773, 0
    %v793 = vunpack.c.l.b16 %v757
    %v794 = vunpack.c.l.b16 %v758
    %v795 = vunpack.c.l.b16 %v759
    %v796 = vunpack.c.l.b16 %v760
    %v797 = vunpack.c.l.b16 %v761
    %v798 = vunpack.c.l.b16 %v762
    %v799 = vunpack.c.l.b16 %v763
    %v800 = vunpack.c.l.b16 %v764
    %v801 = vunpack.c.l.b16 %v765
    %v802 = vunpack.c.l.b16 %v766
    %v803 = vunpack.c.l.b16 %v767
    %v804 = vunpack.c.l.b16 %v768
    %v805 = vunpack.c.l.b16 %v769
    %v806 = vunpack.c.l.b16 %v770
    %v807 = vunpack.c.l.b16 %v771
    %v808 = vunpack.c.l.b16 %v772
    %v809 = vpack.c.b16 %v794, %v793
    %v810 = vpack.c.b16 %v796, %v795
    %v811 = vpack.c.b16 %v798, %v797
    %v812 = vpack.c.b16 %v800, %v799
    %v813 = vpack.c.b16 %v802, %v801
    %v814 = vpack.c.b16 %v804, %v803
    %v815 = vpack.c.b16 %v806, %v805
    %v816 = vpack.c.b16 %v808, %v807
    %825 = vmatpush.bf16.msra.mxu0 %v816
    %826 = vmatpush.bf16.msra.mxu0 %v815
    %827 = vmatpush.bf16.msra.mxu0 %v814
    %828 = vmatpush.bf16.msra.mxu0 %v813
    %829 = vmatpush.bf16.msra.mxu0 %v812
    %830 = vmatpush.bf16.msra.mxu0 %v811
    %831 = vmatpush.bf16.msra.mxu0 %v810
    %832 = vmatpush.bf16.msra.mxu0 %v809
    %833 = vmatmul.bf16.gmra.mxu0 %v756
    %v834 = vpop.f32.mrf.mxu0
    %v835 = vadd.f32 %v775, %v834
    %v836 = vpop.f32.mrf.mxu0
    %837 = vdwg.mxu0
    %v838 = vmax.f32 %v835, 0.0
    %v839 = vpack.c.bf16 %v838, %v838
    %v840 = vld [vmem:[#allocation7] sm:$0xf]
    %v841 = vld [vmem:[#allocation7 + $0x4] sm:$0xf]
    %v842 = vld [vmem:[#allocation7 + $0x8] sm:$0xf]
    %v843 = vld [vmem:[#allocation7 + $0xc] sm:$0xf]
    %v844 = vld [vmem:[#allocation7 + $0x10] sm:$0xf]
    %v845 = vld [vmem:[#allocation7 + $0x14] sm:$0xf]
    %v846 = vld [vmem:[#allocation7 + $0x18] sm:$0xf]
    %v847 = vld [vmem:[#allocation7 + $0x1c] sm:$0xf]
    %v848 = vld [vmem:[#allocation7 + $0x20] sm:$0xf]
    %v849 = vld [vmem:[#allocation7 + $0x24] sm:$0xf]
    %v850 = vld [vmem:[#allocation7 + $0x28] sm:$0xf]
    %v851 = vld [vmem:[#allocation7 + $0x2c] sm:$0xf]
    %v852 = vld [vmem:[#allocation7 + $0x30] sm:$0xf]
    %v853 = vld [vmem:[#allocation7 + $0x34] sm:$0xf]
    %v854 = vld [vmem:[#allocation7 + $0x38] sm:$0xf]
    %v855 = vld [vmem:[#allocation7 + $0x3c] sm:$0xf]
    %v856 = vld [vmem:[%s9] sm:$0x1]
    %v858 = vperm.slane %v856, 0
    %v876 = vunpack.c.l.b16 %v840
    %v877 = vunpack.c.l.b16 %v841
    %v878 = vunpack.c.l.b16 %v842
    %v879 = vunpack.c.l.b16 %v843
    %v880 = vunpack.c.l.b16 %v844
    %v881 = vunpack.c.l.b16 %v845
    %v882 = vunpack.c.l.b16 %v846
    %v883 = vunpack.c.l.b16 %v847
    %v884 = vunpack.c.l.b16 %v848
    %v885 = vunpack.c.l.b16 %v849
    %v886 = vunpack.c.l.b16 %v850
    %v887 = vunpack.c.l.b16 %v851
    %v888 = vunpack.c.l.b16 %v852
    %v889 = vunpack.c.l.b16 %v853
    %v890 = vunpack.c.l.b16 %v854
    %v891 = vunpack.c.l.b16 %v855
    %v892 = vpack.c.b16 %v877, %v876
    %v893 = vpack.c.b16 %v879, %v878
    %v894 = vpack.c.b16 %v881, %v880
    %v895 = vpack.c.b16 %v883, %v882
    %v896 = vpack.c.b16 %v885, %v884
    %v897 = vpack.c.b16 %v887, %v886
    %v898 = vpack.c.b16 %v889, %v888
    %v899 = vpack.c.b16 %v891, %v890
    %908 = vmatpush.bf16.msra.mxu0 %v899
    %909 = vmatpush.bf16.msra.mxu0 %v898
    %910 = vmatpush.bf16.msra.mxu0 %v897
    %911 = vmatpush.bf16.msra.mxu0 %v896
    %912 = vmatpush.bf16.msra.mxu0 %v895
    %913 = vmatpush.bf16.msra.mxu0 %v894
    %914 = vmatpush.bf16.msra.mxu0 %v893
    %915 = vmatpush.bf16.msra.mxu0 %v892
    %916 = vmatmul.bf16.gmra.mxu0 %v839
    %v917 = vpop.f32.mrf.mxu0
    %v918 = vadd.f32 %v858, %v917
    %v919 = vpop.f32.mrf.mxu0
    %920 = vdwg.mxu0
    %921 = vst [vmem:[%s10] sm:$0xff] %v918
    // Predicated region
    $region58: #{_forward_jit.1} parent=1 // pred_check
      _
    $region59: #{_forward_jit.1} parent=1 // pred_check_branch
      %923 = sbr.rel (0) target = $region61
    $region60: #{_forward_jit.1} parent=1 // pred_region
      _
    $region61: #{_forward_jit.1} parent=1 // pred_fallthru
      _
    // Predicated region
    $region62: #{_forward_jit.1} parent=1 // pred_check
      _
    $region63: #{_forward_jit.1} parent=1 // pred_check_branch
      %925 = sbr.rel (0) target = $region65
    $region64: #{_forward_jit.1} parent=1 // pred_region
      _
    $region65: #{_forward_jit.1} parent=1 // pred_fallthru
      _
    %926 = vsyncpa [#allocation3], 1
    %927 = vsyncpa [#allocation5], 1
    %928 = vsyncpa [#allocation8], 1

</llo_original>
